<compile_context>
chip_gen: v7x
topology: tpu7x:2x2x1
jax: 0.10.0
libtpu: 0.0.40
codegen_flags: <defaults>
</compile_context>

<pallas_src>
import math

import numpy as np

import jax
import jax.numpy as jnp
from jax.experimental import pallas as pl
from jax.experimental.pallas import tpu as pltpu


# ---------------------------------------------------------------------------
# Host-side scalar logic (mirrors pad_random_affine's sampling + torchvision's
# _get_inverse_affine_matrix).  No tensor compute here.
# ---------------------------------------------------------------------------
def _sample_affine_params(key, angle, translate, scale, shear, img_size):
    """img_size = (width, height), as torchvision's get_image_size."""
    width, height = img_size
    ks = jax.random.split(key, 10)
    u = lambda k: float(jax.random.uniform(k))
    uni = lambda k, lo, hi: float(jax.random.uniform(k, minval=lo, maxval=hi))

    if u(ks[0]) < 0.8 and angle != 0.0:
        angle_v = uni(ks[1], -angle, angle)
    else:
        angle_v = 0.0

    if u(ks[2]) < 0.8 and tuple(translate) != (0, 0):
        max_dx = float(translate[0] * width)
        max_dy = float(translate[1] * height)
        tx = int(round(uni(ks[3], -max_dx, max_dx)))
        ty = int(round(uni(ks[4], -max_dy, max_dy)))
        translations = (tx, ty)
    else:
        translations = (0, 0)

    if u(ks[5]) < 0.8 and not isinstance(scale, float):
        scale_v = float(uni(ks[6], float(scale[0]), float(scale[1])))
    else:
        scale_v = 1.0

    shear_x = shear_y = 0.0
    if u(ks[7]) < 0.8 and tuple(shear) != (0, 0):
        sx_max = float(shear[0])
        shear_x = uni(ks[8], -sx_max, sx_max)
        if shear[1] != 0:
            shear_y = uni(ks[9], -float(shear[1]), float(shear[1]))
        shear_v = (shear_x, shear_y)
    else:
        # original code keeps the module's shear value when the branch is not taken
        shear_v = (float(shear[0]), float(shear[1]))

    pad = round(math.sin(math.radians(abs(angle_v))) * max(img_size))
    pad += max(abs(translations[0]), abs(translations[1]))
    if scale_v < 1.0:
        pad += round(max(img_size) * (1.0 - scale_v) * 0.5)
    if shear_v != (0.0, 0.0):
        pad += round(math.tan(math.radians(max(shear_v))) * max(img_size))
    return angle_v, translations, scale_v, shear_v, int(pad)


def _inverse_affine_matrix(center, angle, translate, scale, shear):
    """Mirror of torchvision.transforms.functional._get_inverse_affine_matrix."""
    rot = math.radians(angle)
    sx = math.radians(shear[0])
    sy = math.radians(shear[1])
    cx, cy = center
    tx, ty = translate
    a = math.cos(rot - sy) / math.cos(sy)
    b = -math.cos(rot - sy) * math.tan(sx) / math.cos(sy) - math.sin(rot)
    c = math.sin(rot - sy) / math.cos(sy)
    d = -math.sin(rot - sy) * math.tan(sx) / math.cos(sy) + math.cos(rot)
    matrix = [d, -b, 0.0, -c, a, 0.0]
    matrix = [m / scale for m in matrix]
    matrix[2] += matrix[0] * (-cx - tx) + matrix[1] * (-cy - ty)
    matrix[5] += matrix[3] * (-cx - tx) + matrix[4] * (-cy - ty)
    matrix[2] += cx
    matrix[5] += cy
    return tuple(matrix)


def _build_axis_weight_factors(H, W, matrix, pad):
    """Per-axis factors of the fused (reflect-pad -> inverse-affine bilinear
    sample -> crop) map.  Returns Wy (P, H), Wx (P, W) float32 such that
    B[p, h*W + w] = Wy[p, h] * Wx[p, w].  O(P*(H+W)) host work, no dense B."""
    PH, PW = H + 2 * pad, W + 2 * pad
    m00, m01, m02, m10, m11, m12 = matrix

    y_out, x_out = np.meshgrid(np.arange(H), np.arange(W), indexing="ij")
    jj = (x_out + pad).astype(np.float64)           # col in padded output (crop offset)
    ii = (y_out + pad).astype(np.float64)           # row in padded output
    x_c = jj - (PW - 1) / 2.0                       # centered coords (affine_grid, ac=False)
    y_c = ii - (PH - 1) / 2.0
    sx = m00 * x_c + m01 * y_c + m02 + (PW - 1) / 2.0   # sample coords in padded image
    sy = m10 * x_c + m11 * y_c + m12 + (PH - 1) / 2.0

    P = H * W

    def axis_weights(src, size_orig):
        size_pad = size_orig + 2 * pad
        src = src.reshape(P)
        i0 = np.floor(src).astype(np.int64)
        frac = src - i0
        Wm = np.zeros((P, size_orig), dtype=np.float64)
        rows = np.arange(P)
        for idx, wt in ((i0, 1.0 - frac), (i0 + 1, frac)):
            valid = (idx >= 0) & (idx < size_pad)           # zeros padding_mode of grid_sample
            k = idx - pad                                   # back to original-image index
            refl = np.where(k < 0, -k,
                            np.where(k > size_orig - 1, 2 * (size_orig - 1) - k, k))
            refl = np.clip(refl, 0, size_orig - 1)
            np.add.at(Wm, (rows, refl), np.where(valid, wt, 0.0))
        return Wm

    Wx_ = axis_weights(sx, W)                    # (P, W)
    Wy_ = axis_weights(sy, H)                    # (P, H)
    return Wy_.astype(np.float32), Wx_.astype(np.float32)


# ---------------------------------------------------------------------------
# Pallas kernel: build B^T column tiles on the fly (Khatri-Rao of the factors)
# and apply them to all N*C planes with one MXU matmul per tile.
# ---------------------------------------------------------------------------
def _resample_kernel(x_ref, wyt_ref, wxt_ref, o_ref):
    # x_ref:   (tm, K)  bf16   planes tile, K = H*W lane-dense
    # wyt_ref: (H, tn)  f32    column tile of Wy^T
    # wxt_ref: (W, tn)  f32    column tile of Wx^T
    # o_ref:   (tm, tn)
    H = wyt_ref.shape[0]
    W = wxt_ref.shape[0]
    tn = o_ref.shape[1]
    # On-the-fly Khatri-Rao build of the B^T column tile in VMEM:
    #   B^T[h*W + w, p] = Wy^T[h, p] * Wx^T[w, p]
    bt = (wyt_ref[...][:, None, :] * wxt_ref[...][None, :, :]).reshape(H * W, tn)
    o_ref[...] = jnp.dot(
        x_ref[...], bt.astype(jnp.bfloat16),
        preferred_element_type=jnp.float32).astype(o_ref.dtype)


def _pick_tiles(M, K, P, H, W):
    """Choose (tm, tn): tn a multiple of 128 (256-aligned when large) or == P;
    per-step working set kept under ~24 MiB so double-buffered tiles fit v7x's
    64 MiB VMEM; always >= 2 total grid steps when P allows (v7x megacore)."""
    budget = 24 << 20
    tm = M if M <= 256 else 256
    # shrink tm if the double-buffered x tile alone would dominate the budget
    while 2 * tm * K * 2 > budget // 2 and tm > 8:
        tm = max(8, (tm // 2) // 8 * 8)
    fixed = 2 * tm * K * 2                               # bf16 x tile, double buffered
    per_tn = 2 * (H + W) * 4 + 2 * tm * 4 + K * 6        # weight + out tiles + bt temps
    tn = max(1, (budget - fixed) // per_tn)
    if tn >= P:
        tn = P
    else:
        tn = max(128, (tn // 128) * 128)
        if tn > 256:
            tn -= tn % 256                               # 2x256x256 MXU alignment
    if pl.cdiv(M, tm) * pl.cdiv(P, tn) < 2 and P >= 256:
        half = -(-P // 2)                                # ceil(P / 2)
        tn = -(-half // 128) * 128                       # round up to 128
    return tm, tn


def _apply_resample(x, wyt, wxt, out_dtype):
    M, K = x.shape
    H, P = wyt.shape
    W = wxt.shape[0]
    tm, tn = _pick_tiles(M, K, P, H, W)
    grid = (pl.cdiv(M, tm), pl.cdiv(P, tn))   # i (plane tiles) outer, j (col tiles) inner

    # Explicit scoped-VMEM limit sized to the actual working set (+ headroom).
    work = 2 * tm * K * 2 + 2 * (H + W) * tn * 4 + 2 * tm * tn * 4 + K * tn * 6
    vmem_limit = int(min(48 << 20, max(16 << 20, int(work * 1.5) + (2 << 20))))

    cost = pl.CostEstimate(
        flops=2 * M * K * P,
        transcendentals=0,
        bytes_accessed=M * K * 2 + P * (H + W) * 4 + M * P * 4,
    )

    return pl.pallas_call(
        _resample_kernel,
        out_shape=jax.ShapeDtypeStruct((M, P), out_dtype),
        grid=grid,
        in_specs=[
            # x's block index is constant along the inner j sweep, so Pallas only
            # re-DMAs it when i changes; its (still reserved) second pipeline
            # buffer is accounted for in the VMEM budget above.
            pl.BlockSpec((tm, K), lambda i, j: (i, 0)),
            pl.BlockSpec((H, tn), lambda i, j: (0, j)),
            pl.BlockSpec((W, tn), lambda i, j: (0, j)),
        ],
        out_specs=pl.BlockSpec((tm, tn), lambda i, j: (i, j)),
        compiler_params=pltpu.CompilerParams(
            dimension_semantics=("parallel", "parallel"),
            vmem_limit_bytes=vmem_limit),
        cost_estimate=cost,
    )(x, wyt, wxt)


def pad_random_affine_pallas(img, matrix, pad):
    """img: (N, C, H, W) f32; matrix: torchvision inverse-affine 2x3; pad: int."""
    N, C, H, W = img.shape
    assert pad < min(H, W), "reflect padding requires pad < min(H, W)"
    Wy, Wx = _build_axis_weight_factors(H, W, matrix, pad)   # (P,H), (P,W) f32, tiny
    wyt = jnp.asarray(np.ascontiguousarray(Wy.T))            # (H, P)
    wxt = jnp.asarray(np.ascontiguousarray(Wx.T))            # (W, P)
    x = img.reshape(N * C, H * W).astype(jnp.bfloat16)       # lane-dense planes
    out = _apply_resample(x, wyt, wxt, img.dtype)            # (N*C, H*W) f32
    return out.reshape(N, C, H, W)


class PadRandomAffinePallas:
    """Pallas/JAX port of PadRandomAffine (bilinear interpolation)."""

    def __init__(self, angle=0, translate=(0, 0), scale=1.0, shear=(0, 0)):
        assert isinstance(angle, (int, float))
        assert isinstance(translate, (tuple, list))
        assert isinstance(scale, (int, float, tuple, list))
        assert isinstance(shear, (tuple, list))
        self.angle = float(angle)
        self.translate = tuple(translate)
        self.scale = scale
        self.shear = tuple(shear)

    def sample_transform(self, key, img_hw):
        H, W = img_hw
        angle_v, translations, scale_v, shear_v, pad = _sample_affine_params(
            key, self.angle, self.translate, self.scale, self.shear, (W, H))
        matrix = _inverse_affine_matrix((0.0, 0.0), angle_v,
                                        [1.0 * t for t in translations],
                                        scale_v, shear_v)
        return matrix, pad

    def __call__(self, img, key):
        H, W = img.shape[-2], img.shape[-1]
        matrix, pad = self.sample_transform(key, (H, W))
        return pad_random_affine_pallas(img, matrix, pad)


# ---------------------------------------------------------------------------
# Independent pure-JAX reference: reflect pad -> bilinear grid_sample (zeros
# OOB, align_corners=False) via explicit gather -> center crop.
# ---------------------------------------------------------------------------
def pad_random_affine_reference(img, matrix, pad):
    N, C, H, W = img.shape
    PH, PW = H + 2 * pad, W + 2 * pad
    padded = jnp.pad(img, ((0, 0), (0, 0), (pad, pad), (pad, pad)), mode="reflect")
    m00, m01, m02, m10, m11, m12 = matrix
    ii, jj = jnp.meshgrid(jnp.arange(PH, dtype=jnp.float32),
                          jnp.arange(PW, dtype=jnp.float32), indexing="ij")
    x_c = jj - (PW - 1) / 2.0
    y_c = ii - (PH - 1) / 2.0
    sx = m00 * x_c + m01 * y_c + m02 + (PW - 1) / 2.0
    sy = m10 * x_c + m11 * y_c + m12 + (PH - 1) / 2.0
    x0 = jnp.floor(sx)
    y0 = jnp.floor(sy)
    fx = sx - x0
    fy = sy - y0

    def tap(yy, xx, wt):
        inb = (xx >= 0) & (xx < PW) & (yy >= 0) & (yy < PH)
        xi = jnp.clip(xx, 0, PW - 1).astype(jnp.int32)
        yi = jnp.clip(yy, 0, PH - 1).astype(jnp.int32)
        vals = padded[:, :, yi, xi]                        # (N, C, PH, PW) gather
        return vals * (wt * inb.astype(img.dtype))[None, None]

    out_full = (tap(y0, x0, (1 - fy) * (1 - fx))
                + tap(y0, x0 + 1, (1 - fy) * fx)
                + tap(y0 + 1, x0, fy * (1 - fx))
                + tap(y0 + 1, x0 + 1, fy * fx))
    return out_full[:, :, pad:pad + H, pad:pad + W]


if __name__ == "__main__":
    N, C, H, W = 2, 4, 16, 16
    key = jax.random.PRNGKey(0)
    k_img, k_aff = jax.random.split(key)
    img = jax.random.uniform(k_img, (N, C, H, W), dtype=jnp.float32)

    # Non-trivial transform: rotation + translation + scale jitter.
    module = PadRandomAffinePallas(angle=20.0, translate=(0.1, 0.1),
                                   scale=(0.7, 1.0), shear=(0, 0))
    matrix, pad = module.sample_transform(k_aff, (H, W))
    out = pad_random_affine_pallas(img, matrix, pad)
    jax.block_until_ready(out)

    ref = pad_random_affine_reference(img, matrix, pad)
    err = float(jnp.max(jnp.abs(out - ref)))
    assert out.shape == img.shape
    assert err < 2e-2, f"mismatch vs gather reference: max abs err {err}"

    # Default-constructed module degenerates to the identity transform.
    ident = PadRandomAffinePallas()
    m_id, pad_id = ident.sample_transform(k_aff, (H, W))
    out_id = pad_random_affine_pallas(img, m_id, pad_id)
    jax.block_until_ready(out_id)
    err_id = float(jnp.max(jnp.abs(out_id - img)))
    assert err_id < 2e-2, f"identity transform mismatch: max abs err {err_id}"

    print("KERNEL_OK")
</pallas_src>

<mosaic_0001>
module attributes {stable_mosaic.version = 11 : i64} {
  func.func @_resample_kernel(%arg0: i32, %arg1: i32, %arg2: memref<8x256xbf16, #tpu.memory_space<vmem>>, %arg3: memref<16x128xf32, #tpu.memory_space<vmem>>, %arg4: memref<16x128xf32, #tpu.memory_space<vmem>>, %arg5: memref<8x128xf32, #tpu.memory_space<vmem>>) attributes {dimension_semantics = [#tpu.dimension_semantics<parallel>, #tpu.dimension_semantics<parallel>], iteration_bounds = array<i64: 1, 2>, scalar_prefetch = 0 : i64, scratch_operands = 0 : i64, tpu.core_type = #tpu.core_type<tc>, window_params = [{transform_indices = @transform_0, window_bounds = array<i64: 8, 256>}, {transform_indices = @transform_1, window_bounds = array<i64: 16, 128>}, {transform_indices = @transform_2, window_bounds = array<i64: 16, 128>}, {transform_indices = @transform_3, window_bounds = array<i64: 8, 128>}]} {
    %c0 = arith.constant 0 : index
    %c0_0 = arith.constant 0 : index
    %0 = vector.load %arg3[%c0, %c0_0] : memref<16x128xf32, #tpu.memory_space<vmem>>, vector<16x128xf32>
    %1 = vector.shape_cast %0 : vector<16x128xf32> to vector<16x1x128xf32>
    %c0_1 = arith.constant 0 : index
    %c0_2 = arith.constant 0 : index
    %2 = vector.load %arg4[%c0_1, %c0_2] : memref<16x128xf32, #tpu.memory_space<vmem>>, vector<16x128xf32>
    %3 = vector.shape_cast %2 : vector<16x128xf32> to vector<1x16x128xf32>
    %4 = vector.broadcast %1 : vector<16x1x128xf32> to vector<16x16x128xf32>
    %5 = vector.broadcast %3 : vector<1x16x128xf32> to vector<16x16x128xf32>
    %6 = arith.mulf %4, %5 : vector<16x16x128xf32>
    %7 = vector.shape_cast %6 : vector<16x16x128xf32> to vector<256x128xf32>
    %c0_3 = arith.constant 0 : index
    %c0_4 = arith.constant 0 : index
    %8 = vector.load %arg2[%c0_3, %c0_4] : memref<8x256xbf16, #tpu.memory_space<vmem>>, vector<8x256xbf16>
    %9 = arith.truncf %7 : vector<256x128xf32> to vector<256x128xbf16>
    %cst = arith.constant dense<0.000000e+00> : vector<8x128xf32>
    %10 = tpu.matmul %8, %9, %cst {dimension_numbers = #tpu.dot_dimension_numbers<[1], [0], [0], [1], [0, 0, 1, 1], [], []>} : vector<8x256xbf16>, vector<256x128xbf16>, vector<8x128xf32> -> vector<8x128xf32>
    %c0_5 = arith.constant 0 : index
    %c0_6 = arith.constant 0 : index
    %11 = vector.load %arg5[%c0_5, %c0_6] : memref<8x128xf32, #tpu.memory_space<vmem>>, vector<8x128xf32>
    tpu.vector_store %arg5[%c0_5, %c0_6], %10 {strides = array<i32>} : memref<8x128xf32, #tpu.memory_space<vmem>>, vector<8x128xf32>,
    return
  }
  func.func @transform_0(%arg0: i32, %arg1: i32) -> (i32, i32) {
    %c0_i32 = arith.constant 0 : i32
    %c0_i32_0 = arith.constant 0 : i32
    return %arg0, %c0_i32 : i32, i32
  }
  func.func @transform_1(%arg0: i32, %arg1: i32) -> (i32, i32) {
    %c0_i32 = arith.constant 0 : i32
    %c0_i32_0 = arith.constant 0 : i32
    return %c0_i32, %arg1 : i32, i32
  }
  func.func @transform_2(%arg0: i32, %arg1: i32) -> (i32, i32) {
    %c0_i32 = arith.constant 0 : i32
    %c0_i32_0 = arith.constant 0 : i32
    return %c0_i32, %arg1 : i32, i32
  }
  func.func @transform_3(%arg0: i32, %arg1: i32) -> (i32, i32) {
    %c0_i32 = arith.constant 0 : i32
    return %arg0, %arg1 : i32, i32
  }
}

</mosaic_0001>

<llo_original>
// kernel: tpu_custom_call.1
$region0: #{tpu_custom_call.1}
  #allocation0 [shape = 'u32[]', space=smem, size = 0x4, offset = 0x4, fixed_abs, tag = 'smem constant byte address 0x4 - core index']
  #allocation1 [shape = 'u32[144,128]{1,0:T(1,128)}', space=vmem, size = 0x12000, scoped, tag = 'internal scratch']
  %s0 = inlined_call_operand.hbm [shape: bf16[8,256], index: 0, kind: input, shape index: {}]
  %s1 = inlined_call_operand.hbm [shape: f32[16,256], index: 1, kind: input, shape index: {}]
  %s2 = inlined_call_operand.hbm [shape: f32[16,256], index: 2, kind: input, shape index: {}]
  %s3 = inlined_call_operand.hbm [shape: f32[8,256], index: 3, kind: output, shape index: {}]
  %s4 = sld [smem:[#allocation0]]
  $region57: #{tpu_custom_call.1} parent=0
    _
  %s6 = ssub.s32 1, %s4
  %s7 = scalar_select 0, %s6, %s4
  $region1: #{tpu_custom_call.1} parent=0
    #allocation2 [shape = 'u8[4096]{0}', space=vmem, size = 0x1000, scoped, tag = 'input window, operand 0, single buffered']
    #allocation3 [shape = 's32[2]{0}', space=sflag, size = 0x8, scoped, tag = 'scoped memory for tpu_custom_call.1']
    #allocation4 [shape = 's32[2]{0}', space=sflag, size = 0x8, scoped, tag = 'scoped memory for tpu_custom_call.1']
    #allocation5 [shape = 'u8[16384]{0}', space=vmem, size = 0x4000, scoped, tag = 'input window, operand 1']
    #allocation6 [shape = 's32[2]{0}', space=sflag, size = 0x8, scoped, tag = 'scoped memory for tpu_custom_call.1']
    #allocation7 [shape = 'u8[16384]{0}', space=vmem, size = 0x4000, scoped, tag = 'input window, operand 2']
    #allocation8 [shape = 'u8[8192]{0}', space=vmem, size = 0x2000, scoped, tag = 'output window, operand 0']
    %8 = vsyncpa [#allocation3], 0
    %9 = vsyncpa [#allocation6], 0
    %s10 = scalar_lea.sflag [#allocation6], 1
    %11 = vsyncpa %s10, 0
    %12 = vsyncpa [#allocation4], 0
    %s13 = scalar_lea.sflag [#allocation4], 1
    %14 = vsyncpa %s13, 0
    loop: start=0, step=1, limit=4
    $region2: #{tpu_custom_call.1} parent=1 // loop_pre_header
      _
    $region3: #{tpu_custom_call.1} parent=1 // loop_header
      %s16 = sphi 0, %s20
      %p17 = scmp.ge.s32.totalorder %s16, 4
      %s23 = sphi 0, %s35
      %s24 = sphi 0, %s31
      %s25 = sphi 0, %s23
      %s26 = sphi 0, %s24
      %s27 = sphi 0, %s25
      %s28 = sphi 0, %s26
      %s38 = sphi 0, %s40
      %s41 = sphi 0, %s38
      %s42 = sphi 0, %s41
      %s58 = sphi 0, %s42
      %s64 = sphi 0, %s66
      %s67 = sphi 0, %s64
      %s68 = sphi 0, %s67
      %s84 = sphi 0, %s68
      %s90 = sphi 0, %s92
      %s93 = sphi 0, %s90
      %s94 = sphi 0, %s93
      %s110 = sphi 0, %s94
      %s118 = sphi 0, %s120
      %s121 = sphi 0, %s118
      %s122 = sphi 0, %s121
      %s138 = sphi 0, %s122
    $region4: #{tpu_custom_call.1} parent=1 // loop_header_branch
      %19 = sbr.rel (%p17) target = $region8
    $region5: #{tpu_custom_call.1} parent=1 // loop_body
      %s21 = ssub.s32 %s16, 1
      %s22 = ssub.s32 %s16, 2
      %s29 = sadd.s32 1, %s24
      %p30 = scmp.ge.s32.totalorder %s29, 2
      %s31 = scalar_select %p30, 0, %s29
      %s32 = sadd.s32 1, %s23
      %s33 = scalar_select %p30, %s32, %s23
      %p34 = scmp.ge.s32.totalorder %s33, 1
      %s35 = scalar_select %p34, 0, %s33
      %s36 = ssub.s32 %s23, %s35
      %p37 = scmp.eq.s32.totalorder %s36, 0
      %s39 = sadd.s32 %s38, 1
      %s40 = scalar_select %p37, %s38, %s39
      %p43 = pneg %p37
      %p44 = scmp.eq.s32.totalorder %s16, 1
      %p45 = por %p43, %p44
      %p46 = scmp.ne.s32.totalorder %s38, %s41
      %p47 = scmp.eq.s32.totalorder %s16, 0
      %p48 = por %p46, %p47
      %p49 = scmp.ne.s32.totalorder %s38, %s41
      %p50 = scmp.eq.s32.totalorder %s21, 1
      %p51 = por %p49, %p50
      %p52 = scmp.ne.s32.totalorder %s41, %s42
      %p53 = scmp.eq.s32.totalorder %s21, 0
      %p54 = por %p52, %p53
      %p55 = scmp.ne.s32.totalorder %s41, %s42
      %p56 = scmp.eq.s32.totalorder %s22, 1
      %p57 = por %p55, %p56
      %p59 = scmp.ne.s32.totalorder %s42, %s58
      %p60 = scmp.eq.s32.totalorder %s22, 0
      %p61 = por %p59, %p60
      %s62 = ssub.s32 %s24, %s31
      %p63 = scmp.eq.s32.totalorder %s62, 0
      %s65 = sadd.s32 %s64, 1
      %s66 = scalar_select %p63, %s64, %s65
      %p69 = pneg %p63
      %p70 = scmp.eq.s32.totalorder %s16, 1
      %p71 = por %p69, %p70
      %p72 = scmp.ne.s32.totalorder %s64, %s67
      %p73 = scmp.eq.s32.totalorder %s16, 0
      %p74 = por %p72, %p73
      %p75 = scmp.ne.s32.totalorder %s64, %s67
      %p76 = scmp.eq.s32.totalorder %s21, 1
      %p77 = por %p75, %p76
      %p78 = scmp.ne.s32.totalorder %s67, %s68
      %p79 = scmp.eq.s32.totalorder %s21, 0
      %p80 = por %p78, %p79
      %p81 = scmp.ne.s32.totalorder %s67, %s68
      %p82 = scmp.eq.s32.totalorder %s22, 1
      %p83 = por %p81, %p82
      %p85 = scmp.ne.s32.totalorder %s68, %s84
      %p86 = scmp.eq.s32.totalorder %s22, 0
      %p87 = por %p85, %p86
      %s88 = ssub.s32 %s24, %s31
      %p89 = scmp.eq.s32.totalorder %s88, 0
      %s91 = sadd.s32 %s90, 1
      %s92 = scalar_select %p89, %s90, %s91
      %p95 = pneg %p89
      %p96 = scmp.eq.s32.totalorder %s16, 1
      %p97 = por %p95, %p96
      %p98 = scmp.ne.s32.totalorder %s90, %s93
      %p99 = scmp.eq.s32.totalorder %s16, 0
      %p100 = por %p98, %p99
      %p101 = scmp.ne.s32.totalorder %s90, %s93
      %p102 = scmp.eq.s32.totalorder %s21, 1
      %p103 = por %p101, %p102
      %p104 = scmp.ne.s32.totalorder %s93, %s94
      %p105 = scmp.eq.s32.totalorder %s21, 0
      %p106 = por %p104, %p105
      %p107 = scmp.ne.s32.totalorder %s93, %s94
      %p108 = scmp.eq.s32.totalorder %s22, 1
      %p109 = por %p107, %p108
      %p111 = scmp.ne.s32.totalorder %s94, %s110
      %p112 = scmp.eq.s32.totalorder %s22, 0
      %p113 = por %p111, %p112
      %s114 = ssub.s32 %s23, %s35
      %s115 = ssub.s32 %s24, %s31
      %s116 = sor.u32 %s114, %s115
      %p117 = scmp.eq.s32.totalorder %s116, 0
      %s119 = sadd.s32 %s118, 1
      %s120 = scalar_select %p117, %s118, %s119
      %p123 = pneg %p117
      %p124 = scmp.eq.s32.totalorder %s16, 1
      %p125 = por %p123, %p124
      %p126 = scmp.ne.s32.totalorder %s118, %s121
      %p127 = scmp.eq.s32.totalorder %s16, 0
      %p128 = por %p126, %p127
      %p129 = scmp.ne.s32.totalorder %s118, %s121
      %p130 = scmp.eq.s32.totalorder %s21, 1
      %p131 = por %p129, %p130
      %p132 = scmp.ne.s32.totalorder %s121, %s122
      %p133 = scmp.eq.s32.totalorder %s21, 0
      %p134 = por %p132, %p133
      %p135 = scmp.ne.s32.totalorder %s121, %s122
      %p136 = scmp.eq.s32.totalorder %s22, 1
      %p137 = por %p135, %p136
      %p139 = scmp.ne.s32.totalorder %s122, %s138
      %p140 = scmp.eq.s32.totalorder %s22, 0
      %p141 = por %p139, %p140
      %p142 = scmp.le.s32.totalorder 1, %s16
      %p143 = scmp.lt.s32.totalorder %s16, 3
      %p144 = pnand %p142, %p143
      %p145 = pneg %p144
      // Predicated region
      $region9: #{tpu_custom_call.1} parent=5 // pred_check
        _
      $region10: #{tpu_custom_call.1} parent=5 // pred_check_branch
        %147 = sbr.rel (%p144) target = $region12
      $region11: #{tpu_custom_call.1} parent=5 // pred_region
        %s148 = ssub.s32 %s16, 1
        // Predicated region
        $region13: #{tpu_custom_call.1} parent=11 // pred_check
          %p149 = pneg %p54
        $region14: #{tpu_custom_call.1} parent=11 // pred_check_branch
          %151 = sbr.rel (%p149) target = $region16
        $region15: #{tpu_custom_call.1} parent=11 // pred_region
          %s153 = ssub.s32 128, 128
          %154 = vsyncadd [#allocation3], %s153
          %s155 = smul.addr %s25, 2
          %s156 = smul.addr %s155, 64
          %s157 = scalar_lea.hbm %s0, %s156
          %s159 = sshll.u32 [#allocation2], 4
          %s160 = int_to_ptr.vmem [resolvable:$true] %s159
          %162 = dma.hbm_to_vmem [thread:$0]  %s157, 128, %s160, [#allocation3]
        $region16: #{tpu_custom_call.1} parent=11 // pred_fallthru
          _
      $region12: #{tpu_custom_call.1} parent=5 // pred_fallthru
        _
      %p163 = scmp.lt.s32.totalorder %s16, 2
      // Predicated region
      $region17: #{tpu_custom_call.1} parent=5 // pred_check
        %p164 = pneg %p163
      $region18: #{tpu_custom_call.1} parent=5 // pred_check_branch
        %166 = sbr.rel (%p164) target = $region20
      $region19: #{tpu_custom_call.1} parent=5 // pred_region
        // Predicated region
        $region21: #{tpu_custom_call.1} parent=19 // pred_check
          %p167 = pneg %p74
        $region22: #{tpu_custom_call.1} parent=19 // pred_check_branch
          %169 = sbr.rel (%p167) target = $region24
        $region23: #{tpu_custom_call.1} parent=19 // pred_region
          %s170 = sand.u32 %s16, 1
          %s171 = scalar_lea.sflag [#allocation6], %s170
          %s172 = sand.u32 %s64, 1
          %s173 = smul.addr %s172, 16
          %s174 = scalar_lea.vmem [#allocation5], %s173
          %s176 = ssub.s32 256, 256
          %177 = vsyncadd %s171, %s176
          %s178 = smul.addr %s24, 128
          %s179 = scalar_lea.hbm %s1, %s178
          %s180 = sshll.u32 %s174, 4
          %s181 = int_to_ptr.vmem [resolvable:$true] %s180
          %186 = dma.hbm_to_vmem [thread:$0]  %s179, 256, %s181, %s171, 256, 128, 8
        $region24: #{tpu_custom_call.1} parent=19 // pred_fallthru
          _
        // Predicated region
        $region25: #{tpu_custom_call.1} parent=19 // pred_check
          %p187 = pneg %p100
        $region26: #{tpu_custom_call.1} parent=19 // pred_check_branch
          %189 = sbr.rel (%p187) target = $region28
        $region27: #{tpu_custom_call.1} parent=19 // pred_region
          %s190 = sand.u32 %s16, 1
          %s191 = scalar_lea.sflag [#allocation6], %s190
          %s192 = sand.u32 %s90, 1
          %s193 = smul.addr %s192, 16
          %s194 = scalar_lea.vmem [#allocation7], %s193
          %s196 = ssub.s32 256, 256
          %197 = vsyncadd %s191, %s196
          %s198 = smul.addr %s24, 128
          %s199 = scalar_lea.hbm %s2, %s198
          %s200 = sshll.u32 %s194, 4
          %s201 = int_to_ptr.vmem [resolvable:$true] %s200
          %206 = dma.hbm_to_vmem [thread:$0]  %s199, 256, %s201, %s191, 256, 128, 8
        $region28: #{tpu_custom_call.1} parent=19 // pred_fallthru
          _
      $region20: #{tpu_custom_call.1} parent=5 // pred_fallthru
        _
      %p207 = scmp.le.s32.totalorder 1, %s16
      %p208 = scmp.lt.s32.totalorder %s16, 3
      %p209 = pnand %p207, %p208
      %p210 = pneg %p209
      // Predicated region
      $region29: #{tpu_custom_call.1} parent=5 // pred_check
        _
      $region30: #{tpu_custom_call.1} parent=5 // pred_check_branch
        %212 = sbr.rel (%p209) target = $region32
      $region31: #{tpu_custom_call.1} parent=5 // pred_region
        %s213 = ssub.s32 %s16, 1
        // Predicated region
        $region33: #{tpu_custom_call.1} parent=31 // pred_check
          %p214 = pneg %p54
        $region34: #{tpu_custom_call.1} parent=31 // pred_check_branch
          %216 = sbr.rel (%p214) target = $region36
        $region35: #{tpu_custom_call.1} parent=31 // pred_region
          %217 = dma.done [#allocation3], 128
        $region36: #{tpu_custom_call.1} parent=31 // pred_fallthru
          _
        %s218 = sand.u32 %s21, 1
        %s219 = scalar_lea.sflag [#allocation6], %s218
        %s220 = sand.u32 %s67, 1
        %s221 = smul.addr %s220, 16
        %s222 = scalar_lea.vmem [#allocation5], %s221
        // Predicated region
        $region37: #{tpu_custom_call.1} parent=31 // pred_check
          %p223 = pneg %p80
        $region38: #{tpu_custom_call.1} parent=31 // pred_check_branch
          %225 = sbr.rel (%p223) target = $region40
        $region39: #{tpu_custom_call.1} parent=31 // pred_region
          %226 = dma.done %s219, 256
        $region40: #{tpu_custom_call.1} parent=31 // pred_fallthru
          _
        %s227 = sand.u32 %s21, 1
        %s228 = scalar_lea.sflag [#allocation6], %s227
        %s229 = sand.u32 %s93, 1
        %s230 = smul.addr %s229, 16
        %s231 = scalar_lea.vmem [#allocation7], %s230
        // Predicated region
        $region41: #{tpu_custom_call.1} parent=31 // pred_check
          %p232 = pneg %p106
        $region42: #{tpu_custom_call.1} parent=31 // pred_check_branch
          %234 = sbr.rel (%p232) target = $region44
        $region43: #{tpu_custom_call.1} parent=31 // pred_region
          %235 = dma.done %s228, 256
        $region44: #{tpu_custom_call.1} parent=31 // pred_fallthru
          _
        %p236 = pneg %p54
        %p237 = pneg %p51
        %s238 = sand.u32 %s21, 1
        %s239 = scalar_lea.sflag [#allocation6], %s238
        %s240 = sand.u32 %s67, 1
        %s241 = smul.addr %s240, 16
        %s242 = scalar_lea.vmem [#allocation5], %s241
        %p243 = pneg %p80
        %p244 = pneg %p77
        %s245 = sand.u32 %s21, 1
        %s246 = scalar_lea.sflag [#allocation6], %s245
        %s247 = sand.u32 %s93, 1
        %s248 = smul.addr %s247, 16
        %s249 = scalar_lea.vmem [#allocation7], %s248
        %p250 = pneg %p106
        %p251 = pneg %p103
        %p252 = pneg %p134
        %p253 = pneg %p131
        %s254 = sand.u32 %s121, 1
        %s255 = scalar_lea.sflag [#allocation4], %s254
        %s256 = sand.u32 %s121, 1
        %s257 = smul.addr %s256, 8
        %s258 = scalar_lea.vmem [#allocation8], %s257
        %v260 = vld [vmem:[%s222] sm:$0xff]
        %v261 = vld [vmem:[%s222 + $0x8] sm:$0xff]
        %v264 = vcombine.high %v260, %v260
        %v266 = vunpack.c.l.s4 1966171168
        %v267 = vunpack.c.0.s8 %v266
        %v268 = vlaneseq
        %v269 = vshrl.u32 %v268, 7
        %v270 = vsub.s32 %v267, %v269
        %v271 = vrot.slane %v260, %v270
        %v273 = vunpack.c.l.s4 1966171168
        %v274 = vunpack.c.0.s8 %v273
        %v275 = vlaneseq
        %v276 = vshrl.u32 %v275, 7
        %v277 = vsub.s32 %v274, %v276
        %v278 = vrot.slane %v264, %v277
        %v279 = vcombine.high %v271, %v271
        %v280 = vcombine.high %v278, %v278
        %v282 = vunpack.c.l.s4 1966171168
        %v283 = vunpack.c.0.s8 %v282
        %v284 = vlaneseq
        %v285 = vshrl.u32 %v284, 7
        %v286 = vsub.s32 %v283, %v285
        %v287 = vrot.slane %v271, %v286
        %v289 = vunpack.c.l.s4 1966171168
        %v290 = vunpack.c.0.s8 %v289
        %v291 = vlaneseq
        %v292 = vshrl.u32 %v291, 7
        %v293 = vsub.s32 %v290, %v292
        %v294 = vrot.slane %v278, %v293
        %v296 = vunpack.c.l.s4 1966171168
        %v297 = vunpack.c.0.s8 %v296
        %v298 = vlaneseq
        %v299 = vshrl.u32 %v298, 7
        %v300 = vsub.s32 %v297, %v299
        %v301 = vrot.slane %v279, %v300
        %v303 = vunpack.c.l.s4 1966171168
        %v304 = vunpack.c.0.s8 %v303
        %v305 = vlaneseq
        %v306 = vshrl.u32 %v305, 7
        %v307 = vsub.s32 %v304, %v306
        %v308 = vrot.slane %v280, %v307
        %v309 = vcombine.high %v287, %v287
        %v310 = vcombine.high %v294, %v294
        %v311 = vcombine.high %v301, %v301
        %v312 = vcombine.high %v308, %v308
        %v313 = vcombine.high %v261, %v261
        %v315 = vunpack.c.l.s4 1966171168
        %v316 = vunpack.c.0.s8 %v315
        %v317 = vlaneseq
        %v318 = vshrl.u32 %v317, 7
        %v319 = vsub.s32 %v316, %v318
        %v320 = vrot.slane %v261, %v319
        %v322 = vunpack.c.l.s4 1966171168
        %v323 = vunpack.c.0.s8 %v322
        %v324 = vlaneseq
        %v325 = vshrl.u32 %v324, 7
        %v326 = vsub.s32 %v323, %v325
        %v327 = vrot.slane %v313, %v326
        %v328 = vcombine.high %v320, %v320
        %v329 = vcombine.high %v327, %v327
        %v331 = vunpack.c.l.s4 1966171168
        %v332 = vunpack.c.0.s8 %v331
        %v333 = vlaneseq
        %v334 = vshrl.u32 %v333, 7
        %v335 = vsub.s32 %v332, %v334
        %v336 = vrot.slane %v320, %v335
        %v338 = vunpack.c.l.s4 1966171168
        %v339 = vunpack.c.0.s8 %v338
        %v340 = vlaneseq
        %v341 = vshrl.u32 %v340, 7
        %v342 = vsub.s32 %v339, %v341
        %v343 = vrot.slane %v327, %v342
        %v345 = vunpack.c.l.s4 1966171168
        %v346 = vunpack.c.0.s8 %v345
        %v347 = vlaneseq
        %v348 = vshrl.u32 %v347, 7
        %v349 = vsub.s32 %v346, %v348
        %v350 = vrot.slane %v328, %v349
        %v352 = vunpack.c.l.s4 1966171168
        %v353 = vunpack.c.0.s8 %v352
        %v354 = vlaneseq
        %v355 = vshrl.u32 %v354, 7
        %v356 = vsub.s32 %v353, %v355
        %v357 = vrot.slane %v329, %v356
        %v358 = vcombine.high %v336, %v336
        %v359 = vcombine.high %v343, %v343
        %v360 = vcombine.high %v350, %v350
        %v361 = vcombine.high %v357, %v357
        %v362 = vld [vmem:[%s231] sm:$0xff]
        %v363 = vld [vmem:[%s231 + $0x8] sm:$0xff]
        %v364 = vlaneseq
        %v365 = vshrl.u32 %v364, 7
        %v366 = vsub.s32 0, %v365
        %v367 = vrot.slane %v287, %v366
        %v368 = vlaneseq
        %v369 = vshrl.u32 %v368, 7
        %v370 = vsub.s32 0, %v369
        %v371 = vrot.slane %v301, %v370
        %v372 = vlaneseq
        %v373 = vshrl.u32 %v372, 7
        %v374 = vsub.s32 0, %v373
        %v375 = vrot.slane %v309, %v374
        %v376 = vlaneseq
        %v377 = vshrl.u32 %v376, 7
        %v378 = vsub.s32 0, %v377
        %v379 = vrot.slane %v311, %v378
        %v380 = vlaneseq
        %v381 = vshrl.u32 %v380, 7
        %v382 = vsub.s32 0, %v381
        %v383 = vrot.slane %v294, %v382
        %v384 = vlaneseq
        %v385 = vshrl.u32 %v384, 7
        %v386 = vsub.s32 0, %v385
        %v387 = vrot.slane %v308, %v386
        %v388 = vlaneseq
        %v389 = vshrl.u32 %v388, 7
        %v390 = vsub.s32 0, %v389
        %v391 = vrot.slane %v310, %v390
        %v392 = vlaneseq
        %v393 = vshrl.u32 %v392, 7
        %v394 = vsub.s32 0, %v393
        %v395 = vrot.slane %v312, %v394
        %v396 = vlaneseq
        %v397 = vshrl.u32 %v396, 7
        %v398 = vsub.s32 0, %v397
        %v399 = vrot.slane %v336, %v398
        %v400 = vlaneseq
        %v401 = vshrl.u32 %v400, 7
        %v402 = vsub.s32 0, %v401
        %v403 = vrot.slane %v350, %v402
        %v404 = vlaneseq
        %v405 = vshrl.u32 %v404, 7
        %v406 = vsub.s32 0, %v405
        %v407 = vrot.slane %v358, %v406
        %v408 = vlaneseq
        %v409 = vshrl.u32 %v408, 7
        %v410 = vsub.s32 0, %v409
        %v411 = vrot.slane %v360, %v410
        %v412 = vlaneseq
        %v413 = vshrl.u32 %v412, 7
        %v414 = vsub.s32 0, %v413
        %v415 = vrot.slane %v343, %v414
        %v416 = vlaneseq
        %v417 = vshrl.u32 %v416, 7
        %v418 = vsub.s32 0, %v417
        %v419 = vrot.slane %v357, %v418
        %v420 = vlaneseq
        %v421 = vshrl.u32 %v420, 7
        %v422 = vsub.s32 0, %v421
        %v423 = vrot.slane %v359, %v422
        %v424 = vlaneseq
        %v425 = vshrl.u32 %v424, 7
        %v426 = vsub.s32 0, %v425
        %v427 = vrot.slane %v361, %v426
        %v444 = vmul.f32 %v367, %v362
        %v445 = vmul.f32 %v367, %v363
        %v446 = vmul.f32 %v371, %v362
        %v447 = vmul.f32 %v371, %v363
        %v448 = vmul.f32 %v375, %v362
        %v449 = vmul.f32 %v375, %v363
        %v450 = vmul.f32 %v379, %v362
        %v451 = vmul.f32 %v379, %v363
        %v452 = vmul.f32 %v383, %v362
        %v453 = vmul.f32 %v383, %v363
        %v454 = vmul.f32 %v387, %v362
        %v455 = vmul.f32 %v387, %v363
        %v456 = vmul.f32 %v391, %v362
        %v457 = vmul.f32 %v391, %v363
        %v458 = vmul.f32 %v395, %v362
        %v459 = vmul.f32 %v395, %v363
        %v460 = vmul.f32 %v399, %v362
        %v461 = vmul.f32 %v399, %v363
        %v462 = vmul.f32 %v403, %v362
        %v463 = vmul.f32 %v403, %v363
        %v464 = vmul.f32 %v407, %v362
        %v465 = vmul.f32 %v407, %v363
        %v466 = vmul.f32 %v411, %v362
        %v467 = vmul.f32 %v411, %v363
        %v468 = vmul.f32 %v415, %v362
        %v469 = vmul.f32 %v415, %v363
        %v470 = vmul.f32 %v419, %v362
        %v471 = vmul.f32 %v419, %v363
        %v472 = vmul.f32 %v423, %v362
        %v473 = vmul.f32 %v423, %v363
        %v474 = vmul.f32 %v427, %v362
        %v475 = vmul.f32 %v427, %v363
        %v476 = vld [vmem:[#allocation2] sm:$0xff]
        %v477 = vpack.c.bf16 %v445, %v444
        %v478 = vpack.c.bf16 %v447, %v446
        %v479 = vpack.c.bf16 %v449, %v448
        %v480 = vpack.c.bf16 %v451, %v450
        %v481 = vpack.c.bf16 %v453, %v452
        %v482 = vpack.c.bf16 %v455, %v454
        %v483 = vpack.c.bf16 %v457, %v456
        %v484 = vpack.c.bf16 %v459, %v458
        %v485 = vpack.c.bf16 %v461, %v460
        %v486 = vpack.c.bf16 %v463, %v462
        %v487 = vpack.c.bf16 %v465, %v464
        %v488 = vpack.c.bf16 %v467, %v466
        %v489 = vpack.c.bf16 %v469, %v468
        %v490 = vpack.c.bf16 %v471, %v470
        %v491 = vpack.c.bf16 %v473, %v472
        %v492 = vpack.c.bf16 %v475, %v474
        %v494 = vunpack.c.l.b16 %v476
        %v495 = vunpack.c.h.b16 %v476
        %v496 = vpack.c.b16 %v494, %v494
        %v497 = vpack.c.b16 %v495, %v495
        %500 = vmatprep.subr.bf16.mxu0 0
        %501 = vmatpush1.bf16.msra.mxu0 %v477
        %502 = vmatprep.subr.bf16.mxu0 0
        %503 = vmatpush1.bf16.msra.mxu0 %v478
        %504 = vmatprep.subr.bf16.mxu0 0
        %505 = vmatpush1.bf16.msra.mxu0 %v479
        %506 = vmatprep.subr.bf16.mxu0 0
        %507 = vmatpush1.bf16.msra.mxu0 %v480
        %508 = vmatprep.subr.bf16.mxu0 0
        %509 = vmatpush1.bf16.msra.mxu0 %v481
        %510 = vmatprep.subr.bf16.mxu0 0
        %511 = vmatpush1.bf16.msra.mxu0 %v482
        %512 = vmatprep.subr.bf16.mxu0 0
        %513 = vmatpush1.bf16.msra.mxu0 %v483
        %514 = vmatprep.subr.bf16.mxu0 0
        %515 = vmatpush1.bf16.msra.mxu0 %v484
        %516 = vmatprep.subr.bf16.mxu0 0
        %517 = vmatpush1.bf16.msra.mxu0 %v485
        %518 = vmatprep.subr.bf16.mxu0 0
        %519 = vmatpush1.bf16.msra.mxu0 %v486
        %520 = vmatprep.subr.bf16.mxu0 0
        %521 = vmatpush1.bf16.msra.mxu0 %v487
        %522 = vmatprep.subr.bf16.mxu0 0
        %523 = vmatpush1.bf16.msra.mxu0 %v488
        %524 = vmatprep.subr.bf16.mxu0 0
        %525 = vmatpush1.bf16.msra.mxu0 %v489
        %526 = vmatprep.subr.bf16.mxu0 0
        %527 = vmatpush1.bf16.msra.mxu0 %v490
        %528 = vmatprep.subr.bf16.mxu0 0
        %529 = vmatpush1.bf16.msra.mxu0 %v491
        %530 = vmatprep.subr.bf16.mxu0 0
        %531 = vmatpush1.bf16.msra.mxu0 %v492
        %532 = vmatprep.mubr.bf16.mxu0 %v497
        %533 = vmatmul.mubr.bf16.gmra.mrb[0].mxu0 %v496
        %v534 = vpop.f32.mrb[0].mxu0
        %v535 = vadd.f32 0.0, %v534
        %v536 = vpop.f32.mrb[0].mxu0
        %v537 = vpop.f32.mrb[0].mxu0
        %v538 = vpop.f32.mrb[0].mxu0
        %539 = vdwg.mxu0
        %540 = vst [vmem:[%s258] sm:$0xff] %v535
        %s541 = sand.u32 %s121, 1
        %s542 = scalar_lea.sflag [#allocation4], %s541
        %s543 = sand.u32 %s121, 1
        %s544 = smul.addr %s543, 8
        %s545 = scalar_lea.vmem [#allocation8], %s544
        // Predicated region
        $region45: #{tpu_custom_call.1} parent=31 // pred_check
          %p546 = pneg %p131
        $region46: #{tpu_custom_call.1} parent=31 // pred_check_branch
          %548 = sbr.rel (%p546) target = $region48
        $region47: #{tpu_custom_call.1} parent=31 // pred_region
          %s550 = ssub.s32 128, 128
          %551 = vsyncadd %s542, %s550
          %s552 = smul.addr %s25, 2
          %s553 = sadd.s32 %s26, %s552
          %s554 = smul.addr %s553, 128
          %s555 = scalar_lea.hbm %s3, %s554
          %s557 = sshll.u32 %s545, 4
          %s558 = int_to_ptr.vmem [resolvable:$true] %s557
          %560 = dma.vmem_to_hbm [thread:$0]  %s558, 128, %s555, %s542
        $region48: #{tpu_custom_call.1} parent=31 // pred_fallthru
          _
      $region32: #{tpu_custom_call.1} parent=5 // pred_fallthru
        _
      %p561 = scmp.le.s32.totalorder 2, %s16
      // Predicated region
      $region49: #{tpu_custom_call.1} parent=5 // pred_check
        %p562 = pneg %p561
      $region50: #{tpu_custom_call.1} parent=5 // pred_check_branch
        %564 = sbr.rel (%p562) target = $region52
      $region51: #{tpu_custom_call.1} parent=5 // pred_region
        %s565 = ssub.s32 %s16, 2
        // Predicated region
        $region53: #{tpu_custom_call.1} parent=51 // pred_check
          %p566 = pneg %p137
        $region54: #{tpu_custom_call.1} parent=51 // pred_check_branch
          %568 = sbr.rel (%p566) target = $region56
        $region55: #{tpu_custom_call.1} parent=51 // pred_region
          %s569 = sand.u32 %s122, 1
          %s570 = scalar_lea.sflag [#allocation4], %s569
          %s571 = sand.u32 %s122, 1
          %s572 = smul.addr %s571, 8
          %s573 = scalar_lea.vmem [#allocation8], %s572
          %574 = dma.done %s570, 128
        $region56: #{tpu_custom_call.1} parent=51 // pred_fallthru
          _
      $region52: #{tpu_custom_call.1} parent=5 // pred_fallthru
        _
    $region6: #{tpu_custom_call.1} parent=1 // loop_footer
      %s20 = sadd.s32 1, %s16
    $region7: #{tpu_custom_call.1} parent=1 // loop_footer_branch
      %15 = sbr.rel target = $region3
    $region8: #{tpu_custom_call.1} parent=1 // loop_exit
      _
    %575 = vsyncpa [#allocation3], 1
    %s576 = scalar_lea.sflag [#allocation3], 1
    %577 = vsyncpa %s576, 1
    %578 = vsyncpa [#allocation6], 1
    %s579 = scalar_lea.sflag [#allocation6], 1
    %580 = vsyncpa %s579, 1
    %581 = vsyncpa [#allocation4], 1
    %s582 = scalar_lea.sflag [#allocation4], 1
    %583 = vsyncpa %s582, 1

</llo_original>
